<compile_context>
chip_gen: v5e
topology: v5e:2x2
jax: 0.10.0
libtpu: 0.0.40
codegen_flags: <defaults>
</compile_context>

<pallas_src>
import jax
import jax.numpy as jnp
from jax.experimental import pallas as pl
from jax.experimental.pallas import tpu as pltpu


def _spatial_attention_kernel(w_ref, x_ref, o_ref):
    """w_ref: SMEM f32[C]; x_ref, o_ref: VMEM (tb, C, tS) blocks."""
    C = x_ref.shape[1]
    # 1x1 conv with a single output channel == weighted sum over channels.
    # Unrolled scalar-broadcast MADs on (tb, 1, tS) slabs, accumulated in f32.
    # (C is small for this module; for very large C a VMEM-weight/fori variant
    #  would keep trace size down.)
    z = x_ref[:, 0:1, :].astype(jnp.float32) * w_ref[0]
    for c in range(1, C):
        z = z + x_ref[:, c:c + 1, :].astype(jnp.float32) * w_ref[c]
    gate = jax.nn.sigmoid(z)                                   # (tb, 1, tS) f32, EUP
    # Lane-dense full-block store; gate broadcasts over the channel axis.
    o_ref[...] = (x_ref[...].astype(jnp.float32) * gate).astype(o_ref.dtype)


def _cdiv(a, b):
    return -(-a // b)


def _pad_up(v, m):
    return _cdiv(v, m) * m


def _vmem_limit_bytes():
    """Explicit scoped-VMEM limit: ~3/4 of physical (96 MiB v5e/v6e, 48 MiB v7x)."""
    try:
        cap = int(getattr(pltpu.get_tpu_info(), "vmem_capacity_bytes", 0))
    except Exception:
        cap = 0
    if cap <= 0:
        cap = 64 * 1024 * 1024          # conservative default (v7x per-core size)
    return (cap * 3) // 4


def _choose_tiles(N, C, S, itemsize, vmem_limit_bytes):
    """Pick (tb, tS) so 2x in + 2x out double-buffered blocks fit the VMEM limit."""
    sublane = 8 if itemsize >= 4 else (16 if itemsize == 2 else 32)
    c_pad = _pad_up(C, sublane)
    # 4 block-sized pipeline buffers + ~20% headroom for temporaries/spills.
    per_block = max(vmem_limit_bytes // 5, 256 * 1024)

    def block_bytes(tb, ts):
        return tb * c_pad * _pad_up(ts, 128) * itemsize

    # Spatial split only when a single-batch block does not fit the budget.
    if block_bytes(1, S) <= per_block:
        ts = S
    else:
        ts = (per_block // (c_pad * itemsize)) // 128 * 128
        ts = max(128, min(ts, (S // 128) * 128))

    # Largest batch tile that fits, then shrink so the grid has a few steps
    # (double-buffer overlap; lets the two v7x TensorCores split the work).
    tb = max(1, min(N, per_block // max(block_bytes(1, ts), 1)))
    while tb > 1 and _cdiv(N, tb) * _cdiv(S, ts) < 4:
        tb = max(1, tb // 2)
    return tb, ts


def spatial_attention_2d(x, w):
    """x: (N, C, H, W). w: Conv2d(C, 1, 1, bias=False) weight (any shape with C elems)."""
    N, C, H, W = x.shape
    S = H * W
    x3 = x.reshape(N, C, S)                         # lane axis carries H*W (no copy)
    w1 = jnp.asarray(w, jnp.float32).reshape(C)     # SMEM scalars, f32

    vmem_limit = _vmem_limit_bytes()
    tb, ts = _choose_tiles(N, C, S, x.dtype.itemsize, vmem_limit)
    grid = (_cdiv(N, tb), _cdiv(S, ts))

    out3 = pl.pallas_call(
        _spatial_attention_kernel,
        out_shape=jax.ShapeDtypeStruct((N, C, S), x.dtype),
        grid_spec=pltpu.PrefetchScalarGridSpec(
            num_scalar_prefetch=0,
            grid=grid,
            in_specs=[
                pl.BlockSpec(memory_space=pltpu.MemorySpace.SMEM),      # conv weight
                pl.BlockSpec((tb, C, ts), lambda i, j: (i, 0, j)),      # x tile
            ],
            out_specs=pl.BlockSpec((tb, C, ts), lambda i, j: (i, 0, j)),
        ),
        compiler_params=pltpu.CompilerParams(
            dimension_semantics=("parallel", "parallel"),
            vmem_limit_bytes=int(vmem_limit),
        ),
    )(w1, x3)
    return out3.reshape(N, C, H, W)


def spatial_attention_2d_reference(x, w):
    """Pure-JAX reference matching the PyTorch forward (Conv2d(C,1,1,bias=False))."""
    C = x.shape[1]
    w_ = jnp.asarray(w, jnp.float32).reshape(1, C, 1, 1)
    z = jnp.sum(x.astype(jnp.float32) * w_, axis=1, keepdims=True)
    return (x.astype(jnp.float32) * jax.nn.sigmoid(z)).astype(x.dtype)


if __name__ == "__main__":
    N, C, H, W = 2, 4, 16, 16

    key = jax.random.PRNGKey(0)
    kx, kw = jax.random.split(key)
    x = jax.random.normal(kx, (N, C, H, W), dtype=jnp.float32)
    w = 0.3 * jax.random.normal(kw, (1, C, 1, 1), dtype=jnp.float32)

    out = spatial_attention_2d(x, w)
    out = jax.block_until_ready(out)

    ref = spatial_attention_2d_reference(x, w)
    assert out.shape == (N, C, H, W)
    assert jnp.allclose(out, ref, atol=1e-5, rtol=1e-5), "mismatch vs reference"

    print("KERNEL_OK")
</pallas_src>

<mosaic_0001>
module attributes {stable_mosaic.version = 11 : i64} {
  func.func @_spatial_attention_kernel(%arg0: i32, %arg1: i32, %arg2: memref<4xf32, #tpu.memory_space<smem>>, %arg3: memref<1x4x256xf32, #tpu.memory_space<vmem>>, %arg4: memref<1x4x256xf32, #tpu.memory_space<vmem>>) attributes {dimension_semantics = [#tpu.dimension_semantics<parallel>, #tpu.dimension_semantics<parallel>], iteration_bounds = array<i64: 2, 1>, scalar_prefetch = 0 : i64, scratch_operands = 0 : i64, tpu.core_type = #tpu.core_type<tc>, window_params = [{transform_indices = @transform_0, window_bounds = array<i64: 4>}, {transform_indices = @transform_1, window_bounds = array<i64: 1, 4, 256>}, {transform_indices = @transform_2, window_bounds = array<i64: 1, 4, 256>}]} {
    %c0 = arith.constant 0 : index
    %c0_0 = arith.constant 0 : index
    %c0_1 = arith.constant 0 : index
    %0 = vector.load %arg3[%c0, %c0_0, %c0_1] : memref<1x4x256xf32, #tpu.memory_space<vmem>>, vector<1x1x256xf32>
    %c0_2 = arith.constant 0 : index
    %1 = memref.load %arg2[%c0_2] : memref<4xf32, #tpu.memory_space<smem>>
    %2 = vector.broadcast %1 : f32 to vector<1x1x256xf32>
    %3 = arith.mulf %0, %2 : vector<1x1x256xf32>
    %c0_3 = arith.constant 0 : index
    %c1 = arith.constant 1 : index
    %c0_4 = arith.constant 0 : index
    %4 = vector.load %arg3[%c0_3, %c1, %c0_4] : memref<1x4x256xf32, #tpu.memory_space<vmem>>, vector<1x1x256xf32>
    %c1_5 = arith.constant 1 : index
    %5 = memref.load %arg2[%c1_5] : memref<4xf32, #tpu.memory_space<smem>>
    %6 = vector.broadcast %5 : f32 to vector<1x1x256xf32>
    %7 = arith.mulf %4, %6 : vector<1x1x256xf32>
    %8 = arith.addf %3, %7 : vector<1x1x256xf32>
    %c0_6 = arith.constant 0 : index
    %c2 = arith.constant 2 : index
    %c0_7 = arith.constant 0 : index
    %9 = vector.load %arg3[%c0_6, %c2, %c0_7] : memref<1x4x256xf32, #tpu.memory_space<vmem>>, vector<1x1x256xf32>
    %c2_8 = arith.constant 2 : index
    %10 = memref.load %arg2[%c2_8] : memref<4xf32, #tpu.memory_space<smem>>
    %11 = vector.broadcast %10 : f32 to vector<1x1x256xf32>
    %12 = arith.mulf %9, %11 : vector<1x1x256xf32>
    %13 = arith.addf %8, %12 : vector<1x1x256xf32>
    %c0_9 = arith.constant 0 : index
    %c3 = arith.constant 3 : index
    %c0_10 = arith.constant 0 : index
    %14 = vector.load %arg3[%c0_9, %c3, %c0_10] : memref<1x4x256xf32, #tpu.memory_space<vmem>>, vector<1x1x256xf32>
    %c3_11 = arith.constant 3 : index
    %15 = memref.load %arg2[%c3_11] : memref<4xf32, #tpu.memory_space<smem>>
    %16 = vector.broadcast %15 : f32 to vector<1x1x256xf32>
    %17 = arith.mulf %14, %16 : vector<1x1x256xf32>
    %18 = arith.addf %13, %17 : vector<1x1x256xf32>
    %19 = arith.negf %18 : vector<1x1x256xf32>
    %20 = math.exp %19 : vector<1x1x256xf32>
    %cst = arith.constant 1.000000e+00 : f32
    %21 = vector.broadcast %cst : f32 to vector<1x1x256xf32>
    %22 = arith.addf %21, %20 : vector<1x1x256xf32>
    %23 = arith.divf %21, %22 : vector<1x1x256xf32>
    %c0_12 = arith.constant 0 : index
    %c0_13 = arith.constant 0 : index
    %c0_14 = arith.constant 0 : index
    %24 = vector.load %arg3[%c0_12, %c0_13, %c0_14] : memref<1x4x256xf32, #tpu.memory_space<vmem>>, vector<1x4x256xf32>
    %25 = vector.broadcast %23 : vector<1x1x256xf32> to vector<1x4x256xf32>
    %26 = arith.mulf %24, %25 : vector<1x4x256xf32>
    %c0_15 = arith.constant 0 : index
    %c0_16 = arith.constant 0 : index
    %c0_17 = arith.constant 0 : index
    %27 = vector.load %arg4[%c0_15, %c0_16, %c0_17] : memref<1x4x256xf32, #tpu.memory_space<vmem>>, vector<1x4x256xf32>
    tpu.vector_store %arg4[%c0_15, %c0_16, %c0_17], %26 {strides = array<i32>} : memref<1x4x256xf32, #tpu.memory_space<vmem>>, vector<1x4x256xf32>,
    return
  }
  func.func @transform_0(%arg0: i32, %arg1: i32) -> i32 {
    %c0_i32 = arith.constant 0 : i32
    %c0_i32_0 = arith.constant 0 : i32
    return %c0_i32 : i32
  }
  func.func @transform_1(%arg0: i32, %arg1: i32) -> (i32, i32, i32) {
    %c0_i32 = arith.constant 0 : i32
    %c0_i32_0 = arith.constant 0 : i32
    return %arg0, %c0_i32, %arg1 : i32, i32, i32
  }
  func.func @transform_2(%arg0: i32, %arg1: i32) -> (i32, i32, i32) {
    %c0_i32 = arith.constant 0 : i32
    %c0_i32_0 = arith.constant 0 : i32
    return %arg0, %c0_i32, %arg1 : i32, i32, i32
  }
}

</mosaic_0001>

<llo_original>
// kernel: tpu_custom_call.1
$region0: #{tpu_custom_call.1}
  #allocation0 [shape = 'u32[]', space=smem, size = 0x4, offset = 0x4, fixed_abs, tag = 'smem constant byte address 0x4 - core index']
  #allocation1 [shape = 'u32[72,128]{1,0:T(1,128)}', space=vmem, size = 0x9000, scoped, tag = 'internal scratch']
  %s0 = inlined_call_operand.hbm [shape: f32[4], index: 0, kind: input, shape index: {}]
  %s1 = inlined_call_operand.hbm [shape: f32[2,4,256], index: 1, kind: input, shape index: {}]
  %s2 = inlined_call_operand.hbm [shape: f32[2,4,256], index: 2, kind: output, shape index: {}]
  %s3 = sld [smem:[#allocation0]]
  $region49: #{tpu_custom_call.1} parent=0
    _
  %s5 = ssub.s32 1, %s3
  %s6 = scalar_select 0, %s5, %s3
  $region1: #{tpu_custom_call.1} parent=0
    #allocation2 [shape = 'u8[512]{0}', space=smem, size = 0x200, scoped, tag = 'input window, operand 0, single buffered']
    #allocation3 [shape = 's32[2]{0}', space=sflag, size = 0x8, scoped, tag = 'scoped memory for tpu_custom_call.1']
    #allocation4 [shape = 's32[2]{0}', space=sflag, size = 0x8, scoped, tag = 'scoped memory for tpu_custom_call.1']
    #allocation5 [shape = 's32[2]{0}', space=sflag, size = 0x8, scoped, tag = 'scoped memory for tpu_custom_call.1']
    #allocation6 [shape = 'u8[8192]{0}', space=vmem, size = 0x2000, scoped, tag = 'input window, operand 1']
    #allocation7 [shape = 'u8[8192]{0}', space=vmem, size = 0x2000, scoped, tag = 'output window, operand 0']
    %7 = vsyncpa [#allocation5], 0
    %8 = vsyncpa [#allocation3], 0
    %s9 = scalar_lea.sflag [#allocation3], 1
    %10 = vsyncpa %s9, 0
    %11 = vsyncpa [#allocation4], 0
    %s12 = scalar_lea.sflag [#allocation4], 1
    %13 = vsyncpa %s12, 0
    loop: start=0, step=1, limit=4
    $region2: #{tpu_custom_call.1} parent=1 // loop_pre_header
      _
    $region3: #{tpu_custom_call.1} parent=1 // loop_header
      %s15 = sphi 0, %s19
      %p16 = scmp.ge.s32.totalorder %s15, 4
      %s22 = sphi 0, %s34
      %s23 = sphi 0, %s30
      %s24 = sphi 0, %s22
      %s25 = sphi 0, %s23
      %s26 = sphi 0, %s24
      %s27 = sphi 0, %s25
      %s35 = sphi 0, %s35
      %s37 = sphi 0, %s35
      %s38 = sphi 0, %s37
      %s52 = sphi 0, %s38
      %s60 = sphi 0, %s62
      %s63 = sphi 0, %s60
      %s64 = sphi 0, %s63
      %s80 = sphi 0, %s64
      %s88 = sphi 0, %s90
      %s91 = sphi 0, %s88
      %s92 = sphi 0, %s91
      %s108 = sphi 0, %s92
    $region4: #{tpu_custom_call.1} parent=1 // loop_header_branch
      %18 = sbr.rel (%p16) target = $region8
    $region5: #{tpu_custom_call.1} parent=1 // loop_body
      %s20 = ssub.s32 %s15, 1
      %s21 = ssub.s32 %s15, 2
      %s28 = sadd.s32 1, %s23
      %p29 = scmp.ge.s32.totalorder %s28, 1
      %s30 = scalar_select %p29, 0, %s28
      %s31 = sadd.s32 1, %s22
      %s32 = scalar_select %p29, %s31, %s22
      %p33 = scmp.ge.s32.totalorder %s32, 2
      %s34 = scalar_select %p33, 0, %s32
      %s36 = sadd.s32 %s35, 1
      %p39 = scmp.eq.s32.totalorder %s15, 1
      %p40 = scmp.ne.s32.totalorder %s35, %s37
      %p41 = scmp.eq.s32.totalorder %s15, 0
      %p42 = por %p40, %p41
      %p43 = scmp.ne.s32.totalorder %s35, %s37
      %p44 = scmp.eq.s32.totalorder %s20, 1
      %p45 = por %p43, %p44
      %p46 = scmp.ne.s32.totalorder %s37, %s38
      %p47 = scmp.eq.s32.totalorder %s20, 0
      %p48 = por %p46, %p47
      %p49 = scmp.ne.s32.totalorder %s37, %s38
      %p50 = scmp.eq.s32.totalorder %s21, 1
      %p51 = por %p49, %p50
      %p53 = scmp.ne.s32.totalorder %s38, %s52
      %p54 = scmp.eq.s32.totalorder %s21, 0
      %p55 = por %p53, %p54
      %s56 = ssub.s32 %s22, %s34
      %s57 = ssub.s32 %s23, %s30
      %s58 = sor.u32 %s56, %s57
      %p59 = scmp.eq.s32.totalorder %s58, 0
      %s61 = sadd.s32 %s60, 1
      %s62 = scalar_select %p59, %s60, %s61
      %p65 = pneg %p59
      %p66 = scmp.eq.s32.totalorder %s15, 1
      %p67 = por %p65, %p66
      %p68 = scmp.ne.s32.totalorder %s60, %s63
      %p69 = scmp.eq.s32.totalorder %s15, 0
      %p70 = por %p68, %p69
      %p71 = scmp.ne.s32.totalorder %s60, %s63
      %p72 = scmp.eq.s32.totalorder %s20, 1
      %p73 = por %p71, %p72
      %p74 = scmp.ne.s32.totalorder %s63, %s64
      %p75 = scmp.eq.s32.totalorder %s20, 0
      %p76 = por %p74, %p75
      %p77 = scmp.ne.s32.totalorder %s63, %s64
      %p78 = scmp.eq.s32.totalorder %s21, 1
      %p79 = por %p77, %p78
      %p81 = scmp.ne.s32.totalorder %s64, %s80
      %p82 = scmp.eq.s32.totalorder %s21, 0
      %p83 = por %p81, %p82
      %s84 = ssub.s32 %s22, %s34
      %s85 = ssub.s32 %s23, %s30
      %s86 = sor.u32 %s84, %s85
      %p87 = scmp.eq.s32.totalorder %s86, 0
      %s89 = sadd.s32 %s88, 1
      %s90 = scalar_select %p87, %s88, %s89
      %p93 = pneg %p87
      %p94 = scmp.eq.s32.totalorder %s15, 1
      %p95 = por %p93, %p94
      %p96 = scmp.ne.s32.totalorder %s88, %s91
      %p97 = scmp.eq.s32.totalorder %s15, 0
      %p98 = por %p96, %p97
      %p99 = scmp.ne.s32.totalorder %s88, %s91
      %p100 = scmp.eq.s32.totalorder %s20, 1
      %p101 = por %p99, %p100
      %p102 = scmp.ne.s32.totalorder %s91, %s92
      %p103 = scmp.eq.s32.totalorder %s20, 0
      %p104 = por %p102, %p103
      %p105 = scmp.ne.s32.totalorder %s91, %s92
      %p106 = scmp.eq.s32.totalorder %s21, 1
      %p107 = por %p105, %p106
      %p109 = scmp.ne.s32.totalorder %s92, %s108
      %p110 = scmp.eq.s32.totalorder %s21, 0
      %p111 = por %p109, %p110
      %p112 = scmp.le.s32.totalorder 1, %s15
      %p113 = scmp.lt.s32.totalorder %s15, 3
      %p114 = pnand %p112, %p113
      %p115 = pneg %p114
      // Predicated region
      $region9: #{tpu_custom_call.1} parent=5 // pred_check
        _
      $region10: #{tpu_custom_call.1} parent=5 // pred_check_branch
        %117 = sbr.rel (%p114) target = $region12
      $region11: #{tpu_custom_call.1} parent=5 // pred_region
        %s118 = ssub.s32 %s15, 1
        // Predicated region
        $region13: #{tpu_custom_call.1} parent=11 // pred_check
          %p119 = pneg %p48
        $region14: #{tpu_custom_call.1} parent=11 // pred_check_branch
          %121 = sbr.rel (%p119) target = $region16
        $region15: #{tpu_custom_call.1} parent=11 // pred_region
          %123 = vsyncadd [#allocation5], 0
          %s125 = sshll.u32 %s0, 4
          %s126 = int_to_ptr.hbm [resolvable:$true] %s125
          %128 = dma.hbm_to_smem %s126, 16, [#allocation2], [#allocation5]
        $region16: #{tpu_custom_call.1} parent=11 // pred_fallthru
          _
      $region12: #{tpu_custom_call.1} parent=5 // pred_fallthru
        _
      %p129 = scmp.lt.s32.totalorder %s15, 2
      // Predicated region
      $region17: #{tpu_custom_call.1} parent=5 // pred_check
        %p130 = pneg %p129
      $region18: #{tpu_custom_call.1} parent=5 // pred_check_branch
        %132 = sbr.rel (%p130) target = $region20
      $region19: #{tpu_custom_call.1} parent=5 // pred_region
        // Predicated region
        $region21: #{tpu_custom_call.1} parent=19 // pred_check
          %p133 = pneg %p70
        $region22: #{tpu_custom_call.1} parent=19 // pred_check_branch
          %135 = sbr.rel (%p133) target = $region24
        $region23: #{tpu_custom_call.1} parent=19 // pred_region
          %s136 = sand.u32 %s60, 1
          %s137 = scalar_lea.sflag [#allocation3], %s136
          %s138 = sand.u32 %s60, 1
          %s139 = smul.addr %s138, 8
          %s140 = scalar_lea.vmem [#allocation6], %s139
          %s141 = smul.u32 2, %s23
          %143 = vsyncadd %s137, 0
          %s144 = smul.addr %s22, 2
          %s145 = sadd.s32 %s141, %s144
          %s146 = smul.addr %s145, 4
          %s147 = scalar_lea.hbm %s1, %s146
          %s149 = sshll.u32 %s147, 4
          %s150 = int_to_ptr.hbm [resolvable:$true] %s149
          %s151 = sshll.u32 %s140, 4
          %s152 = int_to_ptr.vmem [resolvable:$true] %s151
          %154 = dma.hbm_to_vmem [thread:$0]  %s150, 128, %s152, %s137
        $region24: #{tpu_custom_call.1} parent=19 // pred_fallthru
          _
      $region20: #{tpu_custom_call.1} parent=5 // pred_fallthru
        _
      %p155 = scmp.le.s32.totalorder 1, %s15
      %p156 = scmp.lt.s32.totalorder %s15, 3
      %p157 = pnand %p155, %p156
      %p158 = pneg %p157
      // Predicated region
      $region25: #{tpu_custom_call.1} parent=5 // pred_check
        _
      $region26: #{tpu_custom_call.1} parent=5 // pred_check_branch
        %160 = sbr.rel (%p157) target = $region28
      $region27: #{tpu_custom_call.1} parent=5 // pred_region
        %s161 = ssub.s32 %s15, 1
        // Predicated region
        $region29: #{tpu_custom_call.1} parent=27 // pred_check
          %p162 = pneg %p48
        $region30: #{tpu_custom_call.1} parent=27 // pred_check_branch
          %164 = sbr.rel (%p162) target = $region32
        $region31: #{tpu_custom_call.1} parent=27 // pred_region
          %166 = dma.done [#allocation5], 16
        $region32: #{tpu_custom_call.1} parent=27 // pred_fallthru
          _
        %s167 = sand.u32 %s63, 1
        %s168 = scalar_lea.sflag [#allocation3], %s167
        %s169 = sand.u32 %s63, 1
        %s170 = smul.addr %s169, 8
        %s171 = scalar_lea.vmem [#allocation6], %s170
        // Predicated region
        $region33: #{tpu_custom_call.1} parent=27 // pred_check
          %p172 = pneg %p76
        $region34: #{tpu_custom_call.1} parent=27 // pred_check_branch
          %174 = sbr.rel (%p172) target = $region36
        $region35: #{tpu_custom_call.1} parent=27 // pred_region
          %176 = dma.done %s168, 128
        $region36: #{tpu_custom_call.1} parent=27 // pred_fallthru
          _
        %177 = sfence
        %p178 = pneg %p48
        %p179 = pneg %p45
        %s180 = sand.u32 %s63, 1
        %s181 = scalar_lea.sflag [#allocation3], %s180
        %s182 = sand.u32 %s63, 1
        %s183 = smul.addr %s182, 8
        %s184 = scalar_lea.vmem [#allocation6], %s183
        %p185 = pneg %p76
        %p186 = pneg %p73
        %p187 = pneg %p104
        %p188 = pneg %p101
        %s189 = sand.u32 %s91, 1
        %s190 = scalar_lea.sflag [#allocation4], %s189
        %s191 = sand.u32 %s91, 1
        %s192 = smul.addr %s191, 8
        %s193 = scalar_lea.vmem [#allocation7], %s192
        %s194 = smul.u32 2, %s25
        %s195 = smul.u32 2, %s25
        %v196 = vld [vmem:[%s171] ss:$4 sm:$0x3]
        %s197 = sld [smem:[#allocation2]]
        %v198 = vstv %s197
        %v199 = vmul.f32 %v196, %v198
        %s200 = scalar_lea.vmem %s171, 1 [#allocation6]
        %v201 = vld [vmem:[%s200] ss:$4 sm:$0x3]
        %s202 = sld [smem:[#allocation2 + $0x1]]
        %v203 = vstv %s202
        %v204 = vmul.f32 %v201, %v203
        %v205 = vadd.f32 %v199, %v204
        %s206 = scalar_lea.vmem %s171, 2 [#allocation6]
        %v207 = vld [vmem:[%s206] ss:$4 sm:$0x3]
        %s208 = sld [smem:[#allocation2 + $0x2]]
        %v209 = vstv %s208
        %v210 = vmul.f32 %v207, %v209
        %v211 = vadd.f32 %v205, %v210
        %s212 = scalar_lea.vmem %s171, 3 [#allocation6]
        %v213 = vld [vmem:[%s212] ss:$4 sm:$0x3]
        %s214 = sld [smem:[#allocation2 + $0x3]]
        %v215 = vstv %s214
        %v216 = vmul.f32 %v213, %v215
        %v217 = vadd.f32 %v211, %v216
        %v218 = vxor.u32 %v217, 2147483648
        %v219 = vmul.f32 %v218, 1.442695
        %v220 = vpow.pop %v219
        %v221 = vadd.f32 %v220, 1.0
        %v222 = vrcp.pop %v221
        %v223 = vmul.f32 %v221, %v222
        %v224 = vsub.f32 1.0, %v223
        %v225 = vmul.f32 %v222, %v224
        %v226 = vadd.f32 %v222, %v225
        %vm227 = vweird.f32 %v221
        %vm228 = vweird.f32 %v222
        %vm229 = vmor %vm227, %vm228
        %v230 = vsel %vm229, %v222, %v226
        %v231 = vand.u32 2147483647, %v221
        %vm232 = vcmp.eq.f32.partialorder %v231, 8.507059e+37
        %v233 = vand.u32 %v221, 2147483648
        %v234 = vor.u32 1.1754944e-38, %v233
        %v235 = vsel %vm232, %v234, %v230
        %v236 = vmul.f32 1.0, %v235
        %v237 = vld [vmem:[%s171] sm:$0xff]
        %v239 = vperm.slane %v236, 0
        %v240 = vperm.slane %v236, 1
        %v241 = vrot.slane %v240, 4
        %vm242 = vcmask 1043456
        %v243 = vsel %vm242, %v239, %v241
        %v245 = vmul.f32 %v237, %v243
        %246 = vst [vmem:[%s193] sm:$0xff] %v245
        %s247 = sand.u32 %s91, 1
        %s248 = scalar_lea.sflag [#allocation4], %s247
        %s249 = sand.u32 %s91, 1
        %s250 = smul.addr %s249, 8
        %s251 = scalar_lea.vmem [#allocation7], %s250
        // Predicated region
        $region37: #{tpu_custom_call.1} parent=27 // pred_check
          %p252 = pneg %p101
        $region38: #{tpu_custom_call.1} parent=27 // pred_check_branch
          %254 = sbr.rel (%p252) target = $region40
        $region39: #{tpu_custom_call.1} parent=27 // pred_region
          %s255 = smul.u32 2, %s25
          %257 = vsyncadd %s248, 0
          %s258 = smul.addr %s24, 2
          %s259 = sadd.s32 %s255, %s258
          %s260 = smul.addr %s259, 4
          %s261 = scalar_lea.hbm %s2, %s260
          %s263 = sshll.u32 %s251, 4
          %s264 = int_to_ptr.vmem [resolvable:$true] %s263
          %s265 = sshll.u32 %s261, 4
          %s266 = int_to_ptr.hbm [resolvable:$true] %s265
          %268 = dma.vmem_to_hbm [thread:$0]  %s264, 128, %s266, %s248
        $region40: #{tpu_custom_call.1} parent=27 // pred_fallthru
          _
      $region28: #{tpu_custom_call.1} parent=5 // pred_fallthru
        _
      %p269 = scmp.le.s32.totalorder 2, %s15
      // Predicated region
      $region41: #{tpu_custom_call.1} parent=5 // pred_check
        %p270 = pneg %p269
      $region42: #{tpu_custom_call.1} parent=5 // pred_check_branch
        %272 = sbr.rel (%p270) target = $region44
      $region43: #{tpu_custom_call.1} parent=5 // pred_region
        %s273 = ssub.s32 %s15, 2
        // Predicated region
        $region45: #{tpu_custom_call.1} parent=43 // pred_check
          %p274 = pneg %p107
        $region46: #{tpu_custom_call.1} parent=43 // pred_check_branch
          %276 = sbr.rel (%p274) target = $region48
        $region47: #{tpu_custom_call.1} parent=43 // pred_region
          %s277 = sand.u32 %s92, 1
          %s278 = scalar_lea.sflag [#allocation4], %s277
          %s279 = sand.u32 %s92, 1
          %s280 = smul.addr %s279, 8
          %s281 = scalar_lea.vmem [#allocation7], %s280
          %283 = dma.done %s278, 128
        $region48: #{tpu_custom_call.1} parent=43 // pred_fallthru
          _
      $region44: #{tpu_custom_call.1} parent=5 // pred_fallthru
        _
    $region6: #{tpu_custom_call.1} parent=1 // loop_footer
      %s19 = sadd.s32 1, %s15
    $region7: #{tpu_custom_call.1} parent=1 // loop_footer_branch
      %14 = sbr.rel target = $region3
    $region8: #{tpu_custom_call.1} parent=1 // loop_exit
      _
    %284 = vsyncpa [#allocation3], 1
    %s285 = scalar_lea.sflag [#allocation3], 1
    %286 = vsyncpa %s285, 1
    %287 = vsyncpa [#allocation4], 1
    %s288 = scalar_lea.sflag [#allocation4], 1
    %289 = vsyncpa %s288, 1
    %290 = vsyncpa [#allocation5], 1
    %s291 = scalar_lea.sflag [#allocation5], 1
    %292 = vsyncpa %s291, 1

</llo_original>
